<compile_context>
chip_gen: v6e
topology: v6e:2x2x1
jax: 0.10.0
libtpu: 0.0.40
codegen_flags: <defaults>
</compile_context>

<pallas_src>
import functools
import math

import jax
import jax.numpy as jnp
from jax.experimental import pallas as pl
from jax.experimental.pallas import tpu as pltpu


def _norm_kernel(x_ref, alpha_ref, bias_ref, o_ref, *, eps, d_model, d_pad):
    """One row-tile of LayerNorm-with-unbiased-std (torch `Norm`).

    x_ref:     (tile_rows, d_pad)   input tile (padded lanes hold zeros)
    alpha_ref: (1, d_pad) float32   scale (padded lanes hold zeros)
    bias_ref:  (1, d_pad) float32   shift (padded lanes hold zeros)
    """
    x = x_ref[...].astype(jnp.float32)

    # ---- two-pass mean / unbiased variance (numerically robust) ----
    # Padded lanes are zero, so the plain row-sum already equals the sum over
    # the real d_model columns.
    mean = jnp.sum(x, axis=-1, keepdims=True) * (1.0 / d_model)
    centered = x - mean
    if d_pad != d_model:
        # Padded lanes of `centered` equal (-mean); mask them out of the
        # variance reduction.
        lane = jax.lax.broadcasted_iota(jnp.int32, (1, d_pad), 1)
        sq = jnp.where(lane < d_model, centered * centered, 0.0)
    else:
        sq = centered * centered

    # torch.std default is the unbiased (N-1) estimator.  Guard d_model == 1
    # against a trace-time divide-by-zero (torch itself yields NaN there).
    inv_nm1 = 1.0 / max(d_model - 1, 1)
    var = jnp.sum(sq, axis=-1, keepdims=True) * inv_nm1
    std = jnp.sqrt(var)

    # Exact reciprocal on the (tile_rows, 1) column turns the full-tile divide
    # into a broadcasted multiply.  Kept exact (not pl.reciprocal(approx=True))
    # to preserve the 2e-5 parity with the torch reference.
    inv = 1.0 / (std + eps)

    out = centered * inv * alpha_ref[...] + bias_ref[...]
    o_ref[...] = out.astype(o_ref.dtype)


def _vmem_limit_bytes():
    """Generation-aware VMEM limit: ~3/4 of physical per-core VMEM, capped.

    v7x (64 MiB/TC)  -> ~48 MiB limit
    v5e/v6e (128 MiB) -> ~96 MiB limit
    """
    try:
        phys = pltpu.get_tpu_info().vmem_capacity_bytes
    except Exception:
        phys = 64 * 1024 * 1024          # conservative fallback (v7x per-TC)
    return min((phys * 3) // 4, 100 * 1024 * 1024)


def _choose_tile_rows(rows, d_pad, itemsize, vmem_limit, max_tile_rows=8192):
    """Largest sublane-aligned row tile whose double-buffered in/out blocks
    (+ ~2 live f32 temps) fit the per-block VMEM budget, capped so the grid
    keeps an even number of steps (>= 2) when there is substantial work."""
    # dtype-aware sublane alignment: f32 -> 8, bf16/f16 -> 16, int8/fp8 -> 32
    align = 8 * max(1, 4 // itemsize)

    block_budget = (vmem_limit * 3) // 5   # headroom for alpha/bias/scratch
    # 2x double-buffered (input + output) blocks + ~2 live full-tile f32 temps
    # (Mosaic fuses the elementwise chain, so 3 temps was over-counting).
    bytes_per_row = d_pad * (4 * itemsize + 2 * 4)
    tile = block_budget // max(bytes_per_row, 1)
    tile = max(align, min(tile, max_tile_rows))
    tile = (tile // align) * align

    if rows <= tile:
        # Everything fits in one block.  If there is enough work, split it in
        # two so the 'parallel' grid axis can be sharded across the two
        # TensorCores of a v7x chip.
        if rows >= 2 * align and rows > 64:
            half = -(-((rows + 1) // 2) // align) * align
            return min(half, rows)
        return rows

    # Prefer an even number of grid steps (megacore balance); shrinking the
    # tile slightly is cheaper than leaving one TensorCore idle on the tail.
    steps = pl.cdiv(rows, tile)
    if steps > 1 and steps % 2 == 1:
        steps += 1
        tile = max(align, -(-pl.cdiv(rows, steps) // align) * align)
    return tile


def norm(x, alpha, bias, eps=1e-6):
    """Pallas implementation of the PyTorch `Norm` module forward."""
    orig_shape = x.shape
    d_model = orig_shape[-1]
    rows = math.prod(orig_shape[:-1]) if len(orig_shape) > 1 else 1

    # Lane-dense layout: pad the normalized axis to a multiple of 128 so
    # stores are full-width vst instead of masked partial stores.
    d_pad = ((d_model + 127) // 128) * 128

    x2 = x.reshape(rows, d_model)
    # Keep alpha/bias in float32 end-to-end: no per-grid-step upcast in-kernel.
    alpha2 = alpha.reshape(1, d_model).astype(jnp.float32)
    bias2 = bias.reshape(1, d_model).astype(jnp.float32)
    if d_pad != d_model:
        pad = d_pad - d_model
        x2 = jnp.pad(x2, ((0, 0), (0, pad)))
        alpha2 = jnp.pad(alpha2, ((0, 0), (0, pad)))
        bias2 = jnp.pad(bias2, ((0, 0), (0, pad)))

    vmem_limit = _vmem_limit_bytes()
    tile_rows = _choose_tile_rows(rows, d_pad, x2.dtype.itemsize, vmem_limit)
    grid = (pl.cdiv(rows, tile_rows),)

    out = pl.pallas_call(
        functools.partial(_norm_kernel, eps=eps, d_model=d_model, d_pad=d_pad),
        out_shape=jax.ShapeDtypeStruct((rows, d_pad), x.dtype),
        grid=grid,
        in_specs=[
            pl.BlockSpec((tile_rows, d_pad), lambda i: (i, 0)),
            pl.BlockSpec((1, d_pad), lambda i: (0, 0)),   # alpha: resident
            pl.BlockSpec((1, d_pad), lambda i: (0, 0)),   # bias:  resident
        ],
        out_specs=pl.BlockSpec((tile_rows, d_pad), lambda i: (i, 0)),
        compiler_params=pltpu.CompilerParams(
            dimension_semantics=("parallel",),
            vmem_limit_bytes=vmem_limit,
        ),
    )(x2, alpha2, bias2)

    if d_pad != d_model:
        out = out[:, :d_model]
    return out.reshape(orig_shape)


if __name__ == "__main__":
    eps = 1e-6

    def ref_norm(x, alpha, bias):
        # Plain-JAX reference matching torch (unbiased std).
        xf = x.astype(jnp.float32)
        mean = jnp.mean(xf, axis=-1, keepdims=True)
        var = jnp.sum((xf - mean) ** 2, axis=-1, keepdims=True) / (x.shape[-1] - 1)
        std = jnp.sqrt(var)
        return (alpha * (xf - mean) / (std + eps) + bias).astype(x.dtype)

    # Case 1: module-sized toy input (d_model=32 -> exercises the 128-lane
    # padding / masked-variance path).  alpha/bias match nn.Parameter init.
    key = jax.random.PRNGKey(0)
    batch, seq, d_model = 2, 8, 32
    x = jax.random.normal(key, (batch, seq, d_model), dtype=jnp.float32)
    alpha = jnp.ones((d_model,), dtype=jnp.float32)
    bias = jnp.zeros((d_model,), dtype=jnp.float32)
    out = jax.block_until_ready(norm(x, alpha, bias, eps=eps))
    assert jnp.allclose(out, ref_norm(x, alpha, bias), atol=2e-5, rtol=2e-5), \
        "mismatch vs reference (padded path)"

    # Case 2: lane-dense d_model (no-padding fast path) with non-trivial
    # alpha / bias.
    d_model2 = 128
    x2 = jax.random.normal(jax.random.PRNGKey(1), (batch, seq, d_model2),
                           dtype=jnp.float32)
    alpha2 = jax.random.normal(jax.random.PRNGKey(2), (d_model2,), jnp.float32)
    bias2 = jax.random.normal(jax.random.PRNGKey(3), (d_model2,), jnp.float32)
    out2 = jax.block_until_ready(norm(x2, alpha2, bias2, eps=eps))
    assert jnp.allclose(out2, ref_norm(x2, alpha2, bias2), atol=2e-5, rtol=2e-5), \
        "mismatch vs reference (lane-dense path)"

    print("KERNEL_OK")
</pallas_src>

<mosaic_0001>
module attributes {stable_mosaic.version = 11 : i64} {
  func.func @_norm_kernel(%arg0: i32, %arg1: memref<16x128xf32, #tpu.memory_space<vmem>>, %arg2: memref<1x128xf32, #tpu.memory_space<vmem>>, %arg3: memref<1x128xf32, #tpu.memory_space<vmem>>, %arg4: memref<16x128xf32, #tpu.memory_space<vmem>>) attributes {dimension_semantics = [#tpu.dimension_semantics<parallel>], iteration_bounds = array<i64: 1>, scalar_prefetch = 0 : i64, scratch_operands = 0 : i64, tpu.core_type = #tpu.core_type<tc>, window_params = [{transform_indices = @transform_0, window_bounds = array<i64: 16, 128>}, {pipeline_mode = #tpu.pipeline_mode<synchronous>, transform_indices = @transform_1, window_bounds = array<i64: 1, 128>}, {pipeline_mode = #tpu.pipeline_mode<synchronous>, transform_indices = @transform_2, window_bounds = array<i64: 1, 128>}, {transform_indices = @transform_3, window_bounds = array<i64: 16, 128>}]} {
    %c0 = arith.constant 0 : index
    %c0_0 = arith.constant 0 : index
    %0 = vector.load %arg1[%c0, %c0_0] : memref<16x128xf32, #tpu.memory_space<vmem>>, vector<16x128xf32>
    %cst = arith.constant dense<0.000000e+00> : vector<16xf32>
    %1 = vector.multi_reduction <add>, %0, %cst [1] : vector<16x128xf32> to vector<16xf32>
    %2 = vector.shape_cast %1 : vector<16xf32> to vector<16x1xf32>
    %cst_1 = arith.constant 3.125000e-02 : f32
    %3 = vector.broadcast %cst_1 : f32 to vector<16x1xf32>
    %4 = arith.mulf %2, %3 : vector<16x1xf32>
    %5 = vector.broadcast %4 : vector<16x1xf32> to vector<16x128xf32>
    %6 = arith.subf %0, %5 : vector<16x128xf32>
    %7 = tpu.iota {dimensions = array<i32: 1>} : vector<1x128xi32>
    %c32_i32 = arith.constant 32 : i32
    %8 = vector.broadcast %c32_i32 : i32 to vector<1x128xi32>
    %9 = arith.cmpi slt, %7, %8 : vector<1x128xi32>
    %10 = arith.mulf %6, %6 : vector<16x128xf32>
    %cst_2 = arith.constant 0.000000e+00 : f32
    %11 = vector.shape_cast %9 : vector<1x128xi1> to vector<1x128xi1>
    %12 = vector.broadcast %11 : vector<1x128xi1> to vector<16x128xi1>
    %13 = vector.broadcast %cst_2 : f32 to vector<16x128xf32>
    %14 = arith.select %12, %10, %13 : vector<16x128xi1>, vector<16x128xf32>
    %cst_3 = arith.constant dense<0.000000e+00> : vector<16xf32>
    %15 = vector.multi_reduction <add>, %14, %cst_3 [1] : vector<16x128xf32> to vector<16xf32>
    %16 = vector.shape_cast %15 : vector<16xf32> to vector<16x1xf32>
    %cst_4 = arith.constant 0.0322580636 : f32
    %17 = vector.broadcast %cst_4 : f32 to vector<16x1xf32>
    %18 = arith.mulf %16, %17 : vector<16x1xf32>
    %19 = math.sqrt %18 : vector<16x1xf32>
    %cst_5 = arith.constant 9.99999997E-7 : f32
    %20 = vector.broadcast %cst_5 : f32 to vector<16x1xf32>
    %21 = arith.addf %19, %20 : vector<16x1xf32>
    %cst_6 = arith.constant 1.000000e+00 : f32
    %22 = vector.broadcast %cst_6 : f32 to vector<16x1xf32>
    %23 = arith.divf %22, %21 : vector<16x1xf32>
    %24 = vector.broadcast %23 : vector<16x1xf32> to vector<16x128xf32>
    %25 = arith.mulf %6, %24 : vector<16x128xf32>
    %c0_7 = arith.constant 0 : index
    %c0_8 = arith.constant 0 : index
    %26 = vector.load %arg2[%c0_7, %c0_8] : memref<1x128xf32, #tpu.memory_space<vmem>>, vector<1x128xf32>
    %27 = vector.broadcast %26 : vector<1x128xf32> to vector<16x128xf32>
    %28 = arith.mulf %25, %27 : vector<16x128xf32>
    %c0_9 = arith.constant 0 : index
    %c0_10 = arith.constant 0 : index
    %29 = vector.load %arg3[%c0_9, %c0_10] : memref<1x128xf32, #tpu.memory_space<vmem>>, vector<1x128xf32>
    %30 = vector.broadcast %29 : vector<1x128xf32> to vector<16x128xf32>
    %31 = arith.addf %28, %30 : vector<16x128xf32>
    %c0_11 = arith.constant 0 : index
    %c0_12 = arith.constant 0 : index
    %32 = vector.load %arg4[%c0_11, %c0_12] : memref<16x128xf32, #tpu.memory_space<vmem>>, vector<16x128xf32>
    tpu.vector_store %arg4[%c0_11, %c0_12], %31 {strides = array<i32>} : memref<16x128xf32, #tpu.memory_space<vmem>>, vector<16x128xf32>,
    return
  }
  func.func @transform_0(%arg0: i32) -> (i32, i32) {
    %c0_i32 = arith.constant 0 : i32
    %c0_i32_0 = arith.constant 0 : i32
    return %arg0, %c0_i32 : i32, i32
  }
  func.func @transform_1(%arg0: i32) -> (i32, i32) {
    %c0_i32 = arith.constant 0 : i32
    %c0_i32_0 = arith.constant 0 : i32
    %c0_i32_1 = arith.constant 0 : i32
    return %c0_i32, %c0_i32_0 : i32, i32
  }
  func.func @transform_2(%arg0: i32) -> (i32, i32) {
    %c0_i32 = arith.constant 0 : i32
    %c0_i32_0 = arith.constant 0 : i32
    %c0_i32_1 = arith.constant 0 : i32
    return %c0_i32, %c0_i32_0 : i32, i32
  }
  func.func @transform_3(%arg0: i32) -> (i32, i32) {
    %c0_i32 = arith.constant 0 : i32
    %c0_i32_0 = arith.constant 0 : i32
    return %arg0, %c0_i32 : i32, i32
  }
}

</mosaic_0001>

<llo_original>
// kernel: tpu_custom_call.1
$region0: #{tpu_custom_call.1}
  #allocation0 [shape = 'u32[]', space=smem, size = 0x4, offset = 0x4, fixed_abs, tag = 'smem constant byte address 0x4 - core index']
  #allocation1 [shape = 'u32[144,128]{1,0:T(1,128)}', space=vmem, size = 0x12000, scoped, tag = 'internal scratch']
  %s0 = inlined_call_operand.hbm [shape: f32[16,128], index: 0, kind: input, shape index: {}]
  %s1 = inlined_call_operand.vmem [shape: f32[1,128], index: 1, kind: input, shape index: {}]
  %s2 = inlined_call_operand.vmem [shape: f32[1,128], index: 2, kind: input, shape index: {}]
  %s3 = inlined_call_operand.hbm [shape: f32[16,128], index: 3, kind: output, shape index: {}]
  %s4 = sld [smem:[#allocation0]]
  $region26: #{tpu_custom_call.1} parent=0
    _
  %s6 = ssub.s32 1, %s4
  %s7 = scalar_select 0, %s6, %s4
  $region1: #{tpu_custom_call.1} parent=0
    #allocation2 [shape = 'u8[8192]{0}', space=vmem, size = 0x2000, scoped, tag = 'input window, operand 0, single buffered']
    #allocation3 [shape = 's32[1]{0}', space=sflag, size = 0x4, scoped, tag = 'scoped memory for tpu_custom_call.1']
    #allocation4 [shape = 's32[1]{0}', space=sflag, size = 0x4, scoped, tag = 'scoped memory for tpu_custom_call.1']
    #allocation5 [shape = 'u8[8192]{0}', space=vmem, size = 0x2000, scoped, tag = 'output window, operand 0, single buffered']
    %8 = vsyncpa [#allocation3], 0
    %9 = vsyncpa [#allocation4], 0
    // Predicated region
    $region2: #{tpu_custom_call.1} parent=1 // pred_check
      _
    $region3: #{tpu_custom_call.1} parent=1 // pred_check_branch
      %11 = sbr.rel (0) target = $region5
    $region4: #{tpu_custom_call.1} parent=1 // pred_region
      %s13 = ssub.s32 256, 256
      %14 = vsyncadd [#allocation3], %s13
      %s15 = sshll.u32 [#allocation2], 4
      %s16 = int_to_ptr.vmem [resolvable:$true] %s15
      %21 = dma.hbm_to_vmem [thread:$0]  %s0, 256, %s16, [#allocation3], 128, 128, 8
    $region5: #{tpu_custom_call.1} parent=1 // pred_fallthru
      _
    // Predicated region
    $region6: #{tpu_custom_call.1} parent=1 // pred_check
      _
    $region7: #{tpu_custom_call.1} parent=1 // pred_check_branch
      %23 = sbr.rel (0) target = $region9
    $region8: #{tpu_custom_call.1} parent=1 // pred_region
      _
    $region9: #{tpu_custom_call.1} parent=1 // pred_fallthru
      _
    // Predicated region
    $region10: #{tpu_custom_call.1} parent=1 // pred_check
      _
    $region11: #{tpu_custom_call.1} parent=1 // pred_check_branch
      %25 = sbr.rel (0) target = $region13
    $region12: #{tpu_custom_call.1} parent=1 // pred_region
      _
    $region13: #{tpu_custom_call.1} parent=1 // pred_fallthru
      _
    // Predicated region
    $region14: #{tpu_custom_call.1} parent=1 // pred_check
      _
    $region15: #{tpu_custom_call.1} parent=1 // pred_check_branch
      %27 = sbr.rel (0) target = $region17
    $region16: #{tpu_custom_call.1} parent=1 // pred_region
      %28 = dma.done [#allocation3], 256
    $region17: #{tpu_custom_call.1} parent=1 // pred_fallthru
      _
    %v29 = vld [vmem:[#allocation2] sm:$0xff]
    %v30 = vld [vmem:[#allocation2 + $0x8] sm:$0xff]
    %31 = vadd.xlane.f32.xlu0 %v29
    %v32 = vpop.xlane.xlu0 %31
    %33 = vadd.xlane.f32.xlu0 %v30
    %v34 = vpop.xlane.xlu0 %33
    %v35 = vmul.f32 %v32, 0.03125
    %v36 = vmul.f32 %v34, 0.03125
    %v37 = vsub.f32 %v29, %v35
    %v38 = vsub.f32 %v30, %v36
    %v39 = vlaneseq
    %v40 = vand.u32 %v39, 127
    %vm41 = vcmp.lt.s32.totalorder %v40, 32
    %v42 = vmul.f32 %v37, %v37
    %v43 = vmul.f32 %v38, %v38
    %v44 = vsel %vm41, 1, 0
    %vm45 = vcmp.eq.s32.totalorder %v44, 1
    %v46 = vsel %vm45, %v42, 0.0
    %v47 = vsel %vm45, %v43, 0.0
    %48 = vadd.xlane.f32.xlu0 %v46
    %v49 = vpop.xlane.xlu0 %48
    %50 = vadd.xlane.f32.xlu0 %v47
    %v51 = vpop.xlane.xlu0 %50
    %v52 = vmul.f32 %v49, 0.032258064
    %v53 = vmul.f32 %v51, 0.032258064
    %v54 = vrsqrt.pop %v52
    %v55 = vmul.f32 %v52, %v54
    %vm56 = vcmp.eq.f32.partialorder %v52, inf
    %v57 = vsel %vm56, %v52, %v55
    %vm58 = vcmp.eq.f32.partialorder %v52, 0.0
    %v59 = vand.u32 %v52, 2147483648
    %v60 = vsel %vm58, %v59, %v57
    %v61 = vrsqrt.pop %v53
    %v62 = vmul.f32 %v53, %v61
    %vm63 = vcmp.eq.f32.partialorder %v53, inf
    %v64 = vsel %vm63, %v53, %v62
    %vm65 = vcmp.eq.f32.partialorder %v53, 0.0
    %v66 = vand.u32 %v53, 2147483648
    %v67 = vsel %vm65, %v66, %v64
    %v68 = vadd.f32 %v60, 1e-06
    %v69 = vadd.f32 %v67, 1e-06
    %v70 = vrcp.pop %v68
    %v71 = vmul.f32 1.0, %v70
    %v72 = vrcp.pop %v69
    %v73 = vmul.f32 1.0, %v72
    %v74 = vmul.f32 %v37, %v71
    %v75 = vmul.f32 %v38, %v73
    %v76 = vld [vmem:[%s1] sm:$0x1]
    %v78 = vlaneseq
    %v79 = vshrl.u32 %v78, 7
    %v80 = vsub.s32 0, %v79
    %v81 = vrot.slane %v76, %v80
    %v83 = vmul.f32 %v74, %v81
    %v84 = vmul.f32 %v75, %v81
    %v85 = vld [vmem:[%s2] sm:$0x1]
    %v87 = vlaneseq
    %v88 = vshrl.u32 %v87, 7
    %v89 = vsub.s32 0, %v88
    %v90 = vrot.slane %v85, %v89
    %v92 = vadd.f32 %v83, %v90
    %v93 = vadd.f32 %v84, %v90
    %94 = vst [vmem:[#allocation5] sm:$0xff] %v92
    %95 = vst [vmem:[#allocation5 + $0x8] sm:$0xff] %v93
    // Predicated region
    $region18: #{tpu_custom_call.1} parent=1 // pred_check
      _
    $region19: #{tpu_custom_call.1} parent=1 // pred_check_branch
      %97 = sbr.rel (0) target = $region21
    $region20: #{tpu_custom_call.1} parent=1 // pred_region
      %s99 = ssub.s32 256, 256
      %100 = vsyncadd [#allocation4], %s99
      %s101 = sshll.u32 [#allocation5], 4
      %s102 = int_to_ptr.vmem [resolvable:$true] %s101
      %107 = dma.vmem_to_hbm [thread:$0]  %s102, 256, %s3, [#allocation4], 128, 128, 8
    $region21: #{tpu_custom_call.1} parent=1 // pred_fallthru
      _
    // Predicated region
    $region22: #{tpu_custom_call.1} parent=1 // pred_check
      _
    $region23: #{tpu_custom_call.1} parent=1 // pred_check_branch
      %109 = sbr.rel (0) target = $region25
    $region24: #{tpu_custom_call.1} parent=1 // pred_region
      %110 = dma.done [#allocation4], 256
    $region25: #{tpu_custom_call.1} parent=1 // pred_fallthru
      _
    %111 = vsyncpa [#allocation3], 1
    %112 = vsyncpa [#allocation4], 1

</llo_original>
